<compile_context>
chip_gen: v5e
topology: v5e:2x2
jax: 0.10.0
libtpu: 0.0.40
codegen_flags: <defaults>
</compile_context>

<pallas_src>
import functools
import math

import jax
import jax.numpy as jnp
from jax.experimental import pallas as pl
from jax.experimental.pallas import tpu as pltpu


def _round_up(x, m):
    return ((x + m - 1) // m) * m


def _cdiv(a, b):
    return (a + b - 1) // b


def _vmem_capacity_bytes():
    """Physical VMEM per TensorCore; conservative 64 MiB (v7x) fallback."""
    try:
        info = pltpu.get_tpu_info()
        cap = getattr(info, "vmem_capacity_bytes", None)
        if cap:
            return int(cap)
    except Exception:
        pass
    return 64 * 1024 * 1024


def head_transform_kernel(x_ref, w_ref, b_ref, gamma_ref, beta_ref, out_ref,
                          *, eps, hidden_size):
    """Fused dense + exact-erf GELU + TF-style LayerNorm on one row tile."""
    # Dense: storage dtype straight into the MXU, f32 accumulation, bias in f32.
    h = jnp.dot(x_ref[...], w_ref[...], preferred_element_type=jnp.float32)
    h = h + b_ref[...].astype(jnp.float32)

    # Exact (erf-form) GELU.  x*erf(x/sqrt2) is even, so
    #   gelu(x) = 0.5*(x + |x|*erf(|x|/sqrt2))
    # which removes the sign select from the Abramowitz-Stegun 7.1.26
    # rational erf approximation (|err| <= 1.5e-7).
    ah = jnp.abs(h)
    za = ah * (1.0 / math.sqrt(2.0))
    t = 1.0 / (1.0 + 0.3275911 * za)
    poly = ((((1.061405429 * t - 1.453152027) * t + 1.421413741) * t
             - 0.284496736) * t + 0.254829592) * t
    erf_abs = 1.0 - poly * jnp.exp(-(za * za))
    h = 0.5 * (h + ah * erf_abs)

    # TF-style LayerNorm (epsilon inside the sqrt).  Single sweep over h for
    # both reductions: var = E[h^2] - E[h]^2.  Zero-padded feature columns
    # contribute exactly zero to both sums, so divide by the real hidden size.
    inv_h = 1.0 / float(hidden_size)
    s1 = jnp.sum(h, axis=-1, keepdims=True)
    s2 = jnp.sum(h * h, axis=-1, keepdims=True)
    u = s1 * inv_h
    var = jnp.maximum(s2 * inv_h - u * u, 0.0)
    y = (h - u) * jax.lax.rsqrt(var + eps)
    y = gamma_ref[...].astype(jnp.float32) * y + beta_ref[...].astype(jnp.float32)

    out_ref[...] = y.astype(out_ref.dtype)


def prepare_head_transform_params(dense_weight, dense_bias, ln_weight, ln_bias,
                                  *, param_dtype=None):
    """One-time parameter prep (hoisted out of the per-call hot path).

    Transposes the PyTorch (out, in) dense weight to the (in, out) layout the
    MXU wants and zero-pads the feature dim to a multiple of 128 so kernel
    stores are lane-dense (no-op for BERT's 768/1024).
    """
    H = dense_weight.shape[0]
    Hp = _round_up(H, 128)

    wt = jnp.asarray(dense_weight).T                 # (in, out)
    b = jnp.asarray(dense_bias).reshape(1, H)
    gamma = jnp.asarray(ln_weight).reshape(1, H)
    beta = jnp.asarray(ln_bias).reshape(1, H)
    if Hp != H:
        pad = Hp - H
        wt = jnp.pad(wt, ((0, pad), (0, pad)))
        b = jnp.pad(b, ((0, 0), (0, pad)))
        gamma = jnp.pad(gamma, ((0, 0), (0, pad)))
        beta = jnp.pad(beta, ((0, 0), (0, pad)))
    if param_dtype is not None:
        wt = wt.astype(param_dtype)
        b = b.astype(param_dtype)
        gamma = gamma.astype(param_dtype)
        beta = beta.astype(param_dtype)
    return {"weight_t": wt, "bias": b, "gamma": gamma, "beta": beta,
            "hidden_size": H, "padded_hidden_size": Hp}


def _estimate_vmem(tm, Hp, in_bytes, out_bytes, w_bytes):
    # Worst case: constants double-buffered (fallback path) + pipelined
    # activation/out tiles + ~6 live (tm, Hp) f32 intermediates in-kernel.
    return (2 * Hp * Hp * w_bytes + 6 * Hp * w_bytes
            + 2 * tm * Hp * (in_bytes + out_bytes)
            + 6 * tm * Hp * 4)


def _choose_row_tile(R, Hp, in_bytes, out_bytes, w_bytes, vmem_cap):
    if R < 8:
        return max(R, 1)
    # 1024-row tiles on 128 MiB parts (v5e/v6e), 512 on 64 MiB (v7x) / unknown.
    max_tm = 1024 if vmem_cap >= (96 << 20) else 512
    tm = min(max_tm, (R // 8) * 8)
    budget = int(vmem_cap * 0.6)
    while tm > 8 and _estimate_vmem(tm, Hp, in_bytes, out_bytes, w_bytes) > budget:
        tm = max(8, ((tm // 2) // 8) * 8)
    # Guarantee >= 2 grid steps when possible so v7x shards rows over both TCs.
    if R >= 16 and _cdiv(R, tm) < 2:
        tm = min(tm, max(8, _round_up(_cdiv(R, 2), 8)))
    return tm


def bert_prediction_head_transform(hidden_states, params, *, eps=1e-12):
    H = params["hidden_size"]
    Hp = params["padded_hidden_size"]
    assert hidden_states.shape[-1] == H

    orig_shape = hidden_states.shape
    x2 = hidden_states.reshape(-1, H)
    R = x2.shape[0]
    if Hp != H:
        # Zero-pad feature columns (zero inputs x zero weight rows keep the
        # matmul exact); no row padding -- the grid handles a partial block.
        x2 = jnp.pad(x2, ((0, 0), (0, Hp - H)))

    wt = params["weight_t"]
    b = params["bias"]
    gamma = params["gamma"]
    beta = params["beta"]

    in_bytes = x2.dtype.itemsize
    out_bytes = hidden_states.dtype.itemsize
    w_bytes = wt.dtype.itemsize
    vmem_cap = _vmem_capacity_bytes()

    tm = _choose_row_tile(R, Hp, in_bytes, out_bytes, w_bytes, vmem_cap)
    grid = (_cdiv(R, tm),)

    est = _estimate_vmem(tm, Hp, in_bytes, out_bytes, w_bytes)
    vmem_limit = max(16 * 1024 * 1024, int(est * 3 // 2))
    vmem_limit = min(vmem_limit, int(vmem_cap * 0.85))
    vmem_limit = max(vmem_limit, est)

    kernel = functools.partial(head_transform_kernel, eps=eps, hidden_size=H)

    def build(single_buffer_consts):
        const_kw = ({"pipeline_mode": pl.Buffered(1)}
                    if single_buffer_consts else {})
        return pl.pallas_call(
            kernel,
            out_shape=jax.ShapeDtypeStruct((R, Hp), hidden_states.dtype),
            grid_spec=pltpu.PrefetchScalarGridSpec(
                num_scalar_prefetch=0,
                grid=grid,
                in_specs=[
                    pl.BlockSpec((tm, Hp), lambda i: (i, 0)),              # row tile
                    pl.BlockSpec((Hp, Hp), lambda i: (0, 0), **const_kw),  # weight (in,out)
                    pl.BlockSpec((1, Hp), lambda i: (0, 0), **const_kw),   # bias
                    pl.BlockSpec((1, Hp), lambda i: (0, 0), **const_kw),   # LN gamma
                    pl.BlockSpec((1, Hp), lambda i: (0, 0), **const_kw),   # LN beta
                ],
                out_specs=pl.BlockSpec((tm, Hp), lambda i: (i, 0)),
            ),
            compiler_params=pltpu.CompilerParams(
                dimension_semantics=("parallel",),
                vmem_limit_bytes=vmem_limit),
        )

    try:
        out = build(True)(x2, wt, b, gamma, beta)
    except Exception:
        # Fallback if this JAX build rejects pipeline_mode=pl.Buffered(1) on
        # the grid-based pipeline: default double-buffered constants.
        out = build(False)(x2, wt, b, gamma, beta)

    if Hp != H:
        out = out[:, :H]
    return out.reshape(orig_shape)


if __name__ == "__main__":
    # Small shapes consistent with the module: batch=2, seq=8, hidden=32.
    B, S, H = 2, 8, 32

    key = jax.random.PRNGKey(0)
    k1, k2, k3, k4, k5 = jax.random.split(key, 5)

    hidden_states = jax.random.normal(k1, (B, S, H), jnp.float32)
    dense_weight = jax.random.normal(k2, (H, H), jnp.float32) / math.sqrt(H)   # PyTorch (out, in)
    dense_bias = 0.1 * jax.random.normal(k3, (H,), jnp.float32)
    ln_weight = jnp.ones((H,), jnp.float32) + 0.1 * jax.random.normal(k4, (H,), jnp.float32)
    ln_bias = 0.1 * jax.random.normal(k5, (H,), jnp.float32)

    # One-time parameter prep (transpose + feature padding) out of the hot path.
    params = prepare_head_transform_params(dense_weight, dense_bias,
                                           ln_weight, ln_bias)

    out = bert_prediction_head_transform(hidden_states, params)
    out = jax.block_until_ready(out)

    # Pure-JAX reference of the PyTorch forward.
    h = jnp.dot(hidden_states.reshape(-1, H), dense_weight.T,
                precision=jax.lax.Precision.HIGHEST).reshape(B, S, H) + dense_bias
    h = h * 0.5 * (1.0 + jax.lax.erf(h / math.sqrt(2.0)))
    u = h.mean(-1, keepdims=True)
    s = ((h - u) ** 2).mean(-1, keepdims=True)
    ref = ln_weight * ((h - u) / jnp.sqrt(s + 1e-12)) + ln_bias

    assert out.shape == (B, S, H)
    assert out.dtype == jnp.float32
    assert jnp.allclose(out, ref, atol=1e-5, rtol=1e-5)
    print("KERNEL_OK")
</pallas_src>

<mosaic_0001>
module attributes {stable_mosaic.version = 11 : i64} {
  func.func @head_transform_kernel(%arg0: i32, %arg1: memref<8x128xf32, #tpu.memory_space<vmem>>, %arg2: memref<128x128xf32, #tpu.memory_space<vmem>>, %arg3: memref<1x128xf32, #tpu.memory_space<vmem>>, %arg4: memref<1x128xf32, #tpu.memory_space<vmem>>, %arg5: memref<1x128xf32, #tpu.memory_space<vmem>>, %arg6: memref<8x128xf32, #tpu.memory_space<vmem>>) attributes {dimension_semantics = [#tpu.dimension_semantics<parallel>], iteration_bounds = array<i64: 2>, scalar_prefetch = 0 : i64, scratch_operands = 0 : i64, tpu.core_type = #tpu.core_type<tc>, window_params = [{transform_indices = @transform_0, window_bounds = array<i64: 8, 128>}, {pipeline_mode = #tpu.pipeline_mode<synchronous>, transform_indices = @transform_1, window_bounds = array<i64: 128, 128>}, {pipeline_mode = #tpu.pipeline_mode<synchronous>, transform_indices = @transform_2, window_bounds = array<i64: 1, 128>}, {pipeline_mode = #tpu.pipeline_mode<synchronous>, transform_indices = @transform_3, window_bounds = array<i64: 1, 128>}, {pipeline_mode = #tpu.pipeline_mode<synchronous>, transform_indices = @transform_4, window_bounds = array<i64: 1, 128>}, {transform_indices = @transform_5, window_bounds = array<i64: 8, 128>}]} {
    %c0 = arith.constant 0 : index
    %c0_0 = arith.constant 0 : index
    %0 = vector.load %arg1[%c0, %c0_0] : memref<8x128xf32, #tpu.memory_space<vmem>>, vector<8x128xf32>
    %c0_1 = arith.constant 0 : index
    %c0_2 = arith.constant 0 : index
    %1 = vector.load %arg2[%c0_1, %c0_2] : memref<128x128xf32, #tpu.memory_space<vmem>>, vector<128x128xf32>
    %cst = arith.constant dense<0.000000e+00> : vector<8x128xf32>
    %2 = tpu.matmul %0, %1, %cst {dimension_numbers = #tpu.dot_dimension_numbers<[1], [0], [0], [1], [0, 0, 1, 1], [], []>} : vector<8x128xf32>, vector<128x128xf32>, vector<8x128xf32> -> vector<8x128xf32>
    %c0_3 = arith.constant 0 : index
    %c0_4 = arith.constant 0 : index
    %3 = vector.load %arg3[%c0_3, %c0_4] : memref<1x128xf32, #tpu.memory_space<vmem>>, vector<1x128xf32>
    %4 = vector.broadcast %3 : vector<1x128xf32> to vector<8x128xf32>
    %5 = arith.addf %2, %4 : vector<8x128xf32>
    %6 = math.absf %5 : vector<8x128xf32>
    %cst_5 = arith.constant 0.707106769 : f32
    %7 = vector.broadcast %cst_5 : f32 to vector<8x128xf32>
    %8 = arith.mulf %6, %7 : vector<8x128xf32>
    %cst_6 = arith.constant 0.327591091 : f32
    %9 = vector.broadcast %cst_6 : f32 to vector<8x128xf32>
    %10 = arith.mulf %9, %8 : vector<8x128xf32>
    %cst_7 = arith.constant 1.000000e+00 : f32
    %11 = vector.broadcast %cst_7 : f32 to vector<8x128xf32>
    %12 = arith.addf %11, %10 : vector<8x128xf32>
    %cst_8 = arith.constant 1.000000e+00 : f32
    %13 = vector.broadcast %cst_8 : f32 to vector<8x128xf32>
    %14 = arith.divf %13, %12 : vector<8x128xf32>
    %cst_9 = arith.constant 1.06140542 : f32
    %15 = vector.broadcast %cst_9 : f32 to vector<8x128xf32>
    %16 = arith.mulf %15, %14 : vector<8x128xf32>
    %cst_10 = arith.constant 1.45315206 : f32
    %17 = vector.broadcast %cst_10 : f32 to vector<8x128xf32>
    %18 = arith.subf %16, %17 : vector<8x128xf32>
    %19 = arith.mulf %18, %14 : vector<8x128xf32>
    %cst_11 = arith.constant 1.42141378 : f32
    %20 = vector.broadcast %cst_11 : f32 to vector<8x128xf32>
    %21 = arith.addf %19, %20 : vector<8x128xf32>
    %22 = arith.mulf %21, %14 : vector<8x128xf32>
    %cst_12 = arith.constant 0.284496725 : f32
    %23 = vector.broadcast %cst_12 : f32 to vector<8x128xf32>
    %24 = arith.subf %22, %23 : vector<8x128xf32>
    %25 = arith.mulf %24, %14 : vector<8x128xf32>
    %cst_13 = arith.constant 0.254829586 : f32
    %26 = vector.broadcast %cst_13 : f32 to vector<8x128xf32>
    %27 = arith.addf %25, %26 : vector<8x128xf32>
    %28 = arith.mulf %27, %14 : vector<8x128xf32>
    %29 = arith.mulf %8, %8 : vector<8x128xf32>
    %cst_14 = arith.constant 0.000000e+00 : f32
    %30 = vector.broadcast %cst_14 : f32 to vector<8x128xf32>
    %31 = arith.subf %30, %29 : vector<8x128xf32>
    %32 = math.exp %31 : vector<8x128xf32>
    %33 = arith.mulf %28, %32 : vector<8x128xf32>
    %cst_15 = arith.constant 1.000000e+00 : f32
    %34 = vector.broadcast %cst_15 : f32 to vector<8x128xf32>
    %35 = arith.subf %34, %33 : vector<8x128xf32>
    %36 = arith.mulf %6, %35 : vector<8x128xf32>
    %37 = arith.addf %5, %36 : vector<8x128xf32>
    %cst_16 = arith.constant 5.000000e-01 : f32
    %38 = vector.broadcast %cst_16 : f32 to vector<8x128xf32>
    %39 = arith.mulf %38, %37 : vector<8x128xf32>
    %cst_17 = arith.constant dense<0.000000e+00> : vector<8xf32>
    %40 = vector.multi_reduction <add>, %39, %cst_17 [1] : vector<8x128xf32> to vector<8xf32>
    %41 = vector.shape_cast %40 : vector<8xf32> to vector<8x1xf32>
    %42 = arith.mulf %39, %39 : vector<8x128xf32>
    %cst_18 = arith.constant dense<0.000000e+00> : vector<8xf32>
    %43 = vector.multi_reduction <add>, %42, %cst_18 [1] : vector<8x128xf32> to vector<8xf32>
    %44 = vector.shape_cast %43 : vector<8xf32> to vector<8x1xf32>
    %cst_19 = arith.constant 3.125000e-02 : f32
    %45 = vector.broadcast %cst_19 : f32 to vector<8x1xf32>
    %46 = arith.mulf %41, %45 : vector<8x1xf32>
    %cst_20 = arith.constant 3.125000e-02 : f32
    %47 = vector.broadcast %cst_20 : f32 to vector<8x1xf32>
    %48 = arith.mulf %44, %47 : vector<8x1xf32>
    %49 = arith.mulf %46, %46 : vector<8x1xf32>
    %50 = arith.subf %48, %49 : vector<8x1xf32>
    %cst_21 = arith.constant 0.000000e+00 : f32
    %51 = vector.broadcast %cst_21 : f32 to vector<8x1xf32>
    %52 = arith.maximumf %50, %51 : vector<8x1xf32>
    %53 = vector.broadcast %46 : vector<8x1xf32> to vector<8x128xf32>
    %54 = arith.subf %39, %53 : vector<8x128xf32>
    %cst_22 = arith.constant 9.99999996E-13 : f32
    %55 = vector.broadcast %cst_22 : f32 to vector<8x1xf32>
    %56 = arith.addf %52, %55 : vector<8x1xf32>
    %57 = math.rsqrt %56 : vector<8x1xf32>
    %58 = vector.broadcast %57 : vector<8x1xf32> to vector<8x128xf32>
    %59 = arith.mulf %54, %58 : vector<8x128xf32>
    %c0_23 = arith.constant 0 : index
    %c0_24 = arith.constant 0 : index
    %60 = vector.load %arg4[%c0_23, %c0_24] : memref<1x128xf32, #tpu.memory_space<vmem>>, vector<1x128xf32>
    %61 = vector.broadcast %60 : vector<1x128xf32> to vector<8x128xf32>
    %62 = arith.mulf %61, %59 : vector<8x128xf32>
    %c0_25 = arith.constant 0 : index
    %c0_26 = arith.constant 0 : index
    %63 = vector.load %arg5[%c0_25, %c0_26] : memref<1x128xf32, #tpu.memory_space<vmem>>, vector<1x128xf32>
    %64 = vector.broadcast %63 : vector<1x128xf32> to vector<8x128xf32>
    %65 = arith.addf %62, %64 : vector<8x128xf32>
    %c0_27 = arith.constant 0 : index
    %c0_28 = arith.constant 0 : index
    %66 = vector.load %arg6[%c0_27, %c0_28] : memref<8x128xf32, #tpu.memory_space<vmem>>, vector<8x128xf32>
    tpu.vector_store %arg6[%c0_27, %c0_28], %65 {strides = array<i32>} : memref<8x128xf32, #tpu.memory_space<vmem>>, vector<8x128xf32>,
    return
  }
  func.func @transform_0(%arg0: i32) -> (i32, i32) {
    %c0_i32 = arith.constant 0 : i32
    %c0_i32_0 = arith.constant 0 : i32
    return %arg0, %c0_i32 : i32, i32
  }
  func.func @transform_1(%arg0: i32) -> (i32, i32) {
    %c0_i32 = arith.constant 0 : i32
    %c0_i32_0 = arith.constant 0 : i32
    %c0_i32_1 = arith.constant 0 : i32
    return %c0_i32, %c0_i32_0 : i32, i32
  }
  func.func @transform_2(%arg0: i32) -> (i32, i32) {
    %c0_i32 = arith.constant 0 : i32
    %c0_i32_0 = arith.constant 0 : i32
    %c0_i32_1 = arith.constant 0 : i32
    return %c0_i32, %c0_i32_0 : i32, i32
  }
  func.func @transform_3(%arg0: i32) -> (i32, i32) {
    %c0_i32 = arith.constant 0 : i32
    %c0_i32_0 = arith.constant 0 : i32
    %c0_i32_1 = arith.constant 0 : i32
    return %c0_i32, %c0_i32_0 : i32, i32
  }
  func.func @transform_4(%arg0: i32) -> (i32, i32) {
    %c0_i32 = arith.constant 0 : i32
    %c0_i32_0 = arith.constant 0 : i32
    %c0_i32_1 = arith.constant 0 : i32
    return %c0_i32, %c0_i32_0 : i32, i32
  }
  func.func @transform_5(%arg0: i32) -> (i32, i32) {
    %c0_i32 = arith.constant 0 : i32
    %c0_i32_0 = arith.constant 0 : i32
    return %arg0, %c0_i32 : i32, i32
  }
}

module attributes {stable_mosaic.version = 11 : i64} {
  func.func @head_transform_kernel(%arg0: i32, %arg1: memref<8x128xf32, #tpu.memory_space<vmem>>, %arg2: memref<128x128xf32, #tpu.memory_space<vmem>>, %arg3: memref<1x128xf32, #tpu.memory_space<vmem>>, %arg4: memref<1x128xf32, #tpu.memory_space<vmem>>, %arg5: memref<1x128xf32, #tpu.memory_space<vmem>>, %arg6: memref<8x128xf32, #tpu.memory_space<vmem>>) attributes {dimension_semantics = [#tpu.dimension_semantics<parallel>], iteration_bounds = array<i64: 2>, scalar_prefetch = 0 : i64, scratch_operands = 0 : i64, tpu.core_type = #tpu.core_type<tc>, window_params = [{transform_indices = @transform_0, window_bounds = array<i64: 8, 128>}, {pipeline_mode = #tpu.pipeline_mode<synchronous>, transform_indices = @transform_1, window_bounds = array<i64: 128, 128>}, {pipeline_mode = #tpu.pipeline_mode<synchronous>, transform_indices = @transform_2, window_bounds = array<i64: 1, 128>}, {pipeline_mode = #tpu.pipeline_mode<synchronous>, transform_indices = @transform_3, window_bounds = array<i64: 1, 128>}, {pipeline_mode = #tpu.pipeline_mode<synchronous>, transform_indices = @transform_4, window_bounds = array<i64: 1, 128>}, {transform_indices = @transform_5, window_bounds = array<i64: 8, 128>}]} {
    %c0 = arith.constant 0 : index
    %c0_0 = arith.constant 0 : index
    %0 = vector.load %arg1[%c0, %c0_0] : memref<8x128xf32, #tpu.memory_space<vmem>>, vector<8x128xf32>
    %c0_1 = arith.constant 0 : index
    %c0_2 = arith.constant 0 : index
    %1 = vector.load %arg2[%c0_1, %c0_2] : memref<128x128xf32, #tpu.memory_space<vmem>>, vector<128x128xf32>
    %cst = arith.constant dense<0.000000e+00> : vector<8x128xf32>
    %2 = tpu.matmul %0, %1, %cst {dimension_numbers = #tpu.dot_dimension_numbers<[1], [0], [0], [1], [0, 0, 1, 1], [], []>} : vector<8x128xf32>, vector<128x128xf32>, vector<8x128xf32> -> vector<8x128xf32>
    %c0_3 = arith.constant 0 : index
    %c0_4 = arith.constant 0 : index
    %3 = vector.load %arg3[%c0_3, %c0_4] : memref<1x128xf32, #tpu.memory_space<vmem>>, vector<1x128xf32>
    %4 = vector.broadcast %3 : vector<1x128xf32> to vector<8x128xf32>
    %5 = arith.addf %2, %4 : vector<8x128xf32>
    %6 = math.absf %5 : vector<8x128xf32>
    %cst_5 = arith.constant 0.707106769 : f32
    %7 = vector.broadcast %cst_5 : f32 to vector<8x128xf32>
    %8 = arith.mulf %6, %7 : vector<8x128xf32>
    %cst_6 = arith.constant 0.327591091 : f32
    %9 = vector.broadcast %cst_6 : f32 to vector<8x128xf32>
    %10 = arith.mulf %9, %8 : vector<8x128xf32>
    %cst_7 = arith.constant 1.000000e+00 : f32
    %11 = vector.broadcast %cst_7 : f32 to vector<8x128xf32>
    %12 = arith.addf %11, %10 : vector<8x128xf32>
    %cst_8 = arith.constant 1.000000e+00 : f32
    %13 = vector.broadcast %cst_8 : f32 to vector<8x128xf32>
    %14 = arith.divf %13, %12 : vector<8x128xf32>
    %cst_9 = arith.constant 1.06140542 : f32
    %15 = vector.broadcast %cst_9 : f32 to vector<8x128xf32>
    %16 = arith.mulf %15, %14 : vector<8x128xf32>
    %cst_10 = arith.constant 1.45315206 : f32
    %17 = vector.broadcast %cst_10 : f32 to vector<8x128xf32>
    %18 = arith.subf %16, %17 : vector<8x128xf32>
    %19 = arith.mulf %18, %14 : vector<8x128xf32>
    %cst_11 = arith.constant 1.42141378 : f32
    %20 = vector.broadcast %cst_11 : f32 to vector<8x128xf32>
    %21 = arith.addf %19, %20 : vector<8x128xf32>
    %22 = arith.mulf %21, %14 : vector<8x128xf32>
    %cst_12 = arith.constant 0.284496725 : f32
    %23 = vector.broadcast %cst_12 : f32 to vector<8x128xf32>
    %24 = arith.subf %22, %23 : vector<8x128xf32>
    %25 = arith.mulf %24, %14 : vector<8x128xf32>
    %cst_13 = arith.constant 0.254829586 : f32
    %26 = vector.broadcast %cst_13 : f32 to vector<8x128xf32>
    %27 = arith.addf %25, %26 : vector<8x128xf32>
    %28 = arith.mulf %27, %14 : vector<8x128xf32>
    %29 = arith.mulf %8, %8 : vector<8x128xf32>
    %cst_14 = arith.constant 0.000000e+00 : f32
    %30 = vector.broadcast %cst_14 : f32 to vector<8x128xf32>
    %31 = arith.subf %30, %29 : vector<8x128xf32>
    %32 = math.exp %31 : vector<8x128xf32>
    %33 = arith.mulf %28, %32 : vector<8x128xf32>
    %cst_15 = arith.constant 1.000000e+00 : f32
    %34 = vector.broadcast %cst_15 : f32 to vector<8x128xf32>
    %35 = arith.subf %34, %33 : vector<8x128xf32>
    %36 = arith.mulf %6, %35 : vector<8x128xf32>
    %37 = arith.addf %5, %36 : vector<8x128xf32>
    %cst_16 = arith.constant 5.000000e-01 : f32
    %38 = vector.broadcast %cst_16 : f32 to vector<8x128xf32>
    %39 = arith.mulf %38, %37 : vector<8x128xf32>
    %cst_17 = arith.constant dense<0.000000e+00> : vector<8xf32>
    %40 = vector.multi_reduction <add>, %39, %cst_17 [1] : vector<8x128xf32> to vector<8xf32>
    %41 = vector.shape_cast %40 : vector<8xf32> to vector<8x1xf32>
    %42 = arith.mulf %39, %39 : vector<8x128xf32>
    %cst_18 = arith.constant dense<0.000000e+00> : vector<8xf32>
    %43 = vector.multi_reduction <add>, %42, %cst_18 [1] : vector<8x128xf32> to vector<8xf32>
    %44 = vector.shape_cast %43 : vector<8xf32> to vector<8x1xf32>
    %cst_19 = arith.constant 3.125000e-02 : f32
    %45 = vector.broadcast %cst_19 : f32 to vector<8x1xf32>
    %46 = arith.mulf %41, %45 : vector<8x1xf32>
    %cst_20 = arith.constant 3.125000e-02 : f32
    %47 = vector.broadcast %cst_20 : f32 to vector<8x1xf32>
    %48 = arith.mulf %44, %47 : vector<8x1xf32>
    %49 = arith.mulf %46, %46 : vector<8x1xf32>
    %50 = arith.subf %48, %49 : vector<8x1xf32>
    %cst_21 = arith.constant 0.000000e+00 : f32
    %51 = vector.broadcast %cst_21 : f32 to vector<8x1xf32>
    %52 = arith.maximumf %50, %51 : vector<8x1xf32>
    %53 = vector.broadcast %46 : vector<8x1xf32> to vector<8x128xf32>
    %54 = arith.subf %39, %53 : vector<8x128xf32>
    %cst_22 = arith.constant 9.99999996E-13 : f32
    %55 = vector.broadcast %cst_22 : f32 to vector<8x1xf32>
    %56 = arith.addf %52, %55 : vector<8x1xf32>
    %57 = math.rsqrt %56 : vector<8x1xf32>
    %58 = vector.broadcast %57 : vector<8x1xf32> to vector<8x128xf32>
    %59 = arith.mulf %54, %58 : vector<8x128xf32>
    %c0_23 = arith.constant 0 : index
    %c0_24 = arith.constant 0 : index
    %60 = vector.load %arg4[%c0_23, %c0_24] : memref<1x128xf32, #tpu.memory_space<vmem>>, vector<1x128xf32>
    %61 = vector.broadcast %60 : vector<1x128xf32> to vector<8x128xf32>
    %62 = arith.mulf %61, %59 : vector<8x128xf32>
    %c0_25 = arith.constant 0 : index
    %c0_26 = arith.constant 0 : index
    %63 = vector.load %arg5[%c0_25, %c0_26] : memref<1x128xf32, #tpu.memory_space<vmem>>, vector<1x128xf32>
    %64 = vector.broadcast %63 : vector<1x128xf32> to vector<8x128xf32>
    %65 = arith.addf %62, %64 : vector<8x128xf32>
    %c0_27 = arith.constant 0 : index
    %c0_28 = arith.constant 0 : index
    %66 = vector.load %arg6[%c0_27, %c0_28] : memref<8x128xf32, #tpu.memory_space<vmem>>, vector<8x128xf32>
    tpu.vector_store %arg6[%c0_27, %c0_28], %65 {strides = array<i32>} : memref<8x128xf32, #tpu.memory_space<vmem>>, vector<8x128xf32>,
    return
  }
  func.func @transform_0(%arg0: i32) -> (i32, i32) {
    %c0_i32 = arith.constant 0 : i32
    %c0_i32_0 = arith.constant 0 : i32
    return %arg0, %c0_i32 : i32, i32
  }
  func.func @transform_1(%arg0: i32) -> (i32, i32) {
    %c0_i32 = arith.constant 0 : i32
    %c0_i32_0 = arith.constant 0 : i32
    %c0_i32_1 = arith.constant 0 : i32
    return %c0_i32, %c0_i32_0 : i32, i32
  }
  func.func @transform_2(%arg0: i32) -> (i32, i32) {
    %c0_i32 = arith.constant 0 : i32
    %c0_i32_0 = arith.constant 0 : i32
    %c0_i32_1 = arith.constant 0 : i32
    return %c0_i32, %c0_i32_0 : i32, i32
  }
  func.func @transform_3(%arg0: i32) -> (i32, i32) {
    %c0_i32 = arith.constant 0 : i32
    %c0_i32_0 = arith.constant 0 : i32
    %c0_i32_1 = arith.constant 0 : i32
    return %c0_i32, %c0_i32_0 : i32, i32
  }
  func.func @transform_4(%arg0: i32) -> (i32, i32) {
    %c0_i32 = arith.constant 0 : i32
    %c0_i32_0 = arith.constant 0 : i32
    %c0_i32_1 = arith.constant 0 : i32
    return %c0_i32, %c0_i32_0 : i32, i32
  }
  func.func @transform_5(%arg0: i32) -> (i32, i32) {
    %c0_i32 = arith.constant 0 : i32
    %c0_i32_0 = arith.constant 0 : i32
    return %arg0, %c0_i32 : i32, i32
  }
}

</mosaic_0001>

<llo_original>
// kernel: tpu_custom_call.1
$region0: #{tpu_custom_call.1}
  #allocation0 [shape = 'u32[]', space=smem, size = 0x4, offset = 0x4, fixed_abs, tag = 'smem constant byte address 0x4 - core index']
  #allocation1 [shape = 'u32[72,128]{1,0:T(1,128)}', space=vmem, size = 0x9000, scoped, tag = 'internal scratch']
  %s0 = inlined_call_operand.hbm [shape: f32[16,128], index: 0, kind: input, shape index: {}]
  %s1 = inlined_call_operand.hbm [shape: f32[128,128], index: 1, kind: input, shape index: {}]
  %s2 = inlined_call_operand.vmem [shape: f32[1,128], index: 2, kind: input, shape index: {}]
  %s3 = inlined_call_operand.vmem [shape: f32[1,128], index: 3, kind: input, shape index: {}]
  %s4 = inlined_call_operand.vmem [shape: f32[1,128], index: 4, kind: input, shape index: {}]
  %s5 = inlined_call_operand.hbm [shape: f32[16,128], index: 5, kind: output, shape index: {}]
  %s6 = sld [smem:[#allocation0]]
  $region61: #{tpu_custom_call.1} parent=0
    _
  %s8 = ssub.s32 1, %s6
  %s9 = scalar_select 0, %s8, %s6
  $region1: #{tpu_custom_call.1} parent=0
    #allocation2 [shape = 'u8[8192]{0}', space=vmem, size = 0x2000, scoped, tag = 'input window, operand 0']
    #allocation3 [shape = 's32[2]{0}', space=sflag, size = 0x8, scoped, tag = 'scoped memory for tpu_custom_call.1']
    #allocation4 [shape = 's32[2]{0}', space=sflag, size = 0x8, scoped, tag = 'scoped memory for tpu_custom_call.1']
    #allocation5 [shape = 'u8[65536]{0}', space=vmem, size = 0x10000, scoped, tag = 'input window, operand 1, single buffered']
    #allocation6 [shape = 's32[1]{0}', space=sflag, size = 0x4, scoped, tag = 'scoped memory for tpu_custom_call.1']
    #allocation7 [shape = 'u8[8192]{0}', space=vmem, size = 0x2000, scoped, tag = 'output window, operand 0']
    %10 = vsyncpa [#allocation3], 0
    %s11 = scalar_lea.sflag [#allocation3], 1
    %12 = vsyncpa %s11, 0
    %13 = vsyncpa [#allocation6], 0
    %14 = vsyncpa [#allocation4], 0
    %s15 = scalar_lea.sflag [#allocation4], 1
    %16 = vsyncpa %s15, 0
    loop: start=0, step=1, limit=4
    $region2: #{tpu_custom_call.1} parent=1 // loop_pre_header
      _
    $region3: #{tpu_custom_call.1} parent=1 // loop_header
      %s18 = sphi 0, %s22
      %p19 = scmp.ge.s32.totalorder %s18, 4
      %s28 = sphi 0, %s30
      %s31 = sphi 0, %s28
      %s32 = sphi 0, %s31
      %s48 = sphi 0, %s32
      %s52 = sphi 0, %s52
      %s54 = sphi 0, %s52
      %s55 = sphi 0, %s54
      %s69 = sphi 0, %s55
      %s73 = sphi 0, %s73
      %s75 = sphi 0, %s73
      %s76 = sphi 0, %s75
      %s90 = sphi 0, %s76
      %s94 = sphi 0, %s94
      %s96 = sphi 0, %s94
      %s97 = sphi 0, %s96
      %s111 = sphi 0, %s97
      %s115 = sphi 0, %s115
      %s117 = sphi 0, %s115
      %s118 = sphi 0, %s117
      %s132 = sphi 0, %s118
      %s138 = sphi 0, %s140
      %s141 = sphi 0, %s138
      %s142 = sphi 0, %s141
      %s158 = sphi 0, %s142
    $region4: #{tpu_custom_call.1} parent=1 // loop_header_branch
      %21 = sbr.rel (%p19) target = $region8
    $region5: #{tpu_custom_call.1} parent=1 // loop_body
      %s23 = ssub.s32 %s18, 1
      %s24 = ssub.s32 %s18, 2
      %s25 = sadd.s32 %s18, 1
      %s26 = ssub.s32 %s18, %s25
      %p27 = scmp.eq.s32.totalorder %s26, 0
      %s29 = sadd.s32 %s28, 1
      %s30 = scalar_select %p27, %s28, %s29
      %p33 = pneg %p27
      %p34 = scmp.eq.s32.totalorder %s18, 1
      %p35 = por %p33, %p34
      %p36 = scmp.ne.s32.totalorder %s28, %s31
      %p37 = scmp.eq.s32.totalorder %s18, 0
      %p38 = por %p36, %p37
      %p39 = scmp.ne.s32.totalorder %s28, %s31
      %p40 = scmp.eq.s32.totalorder %s23, 1
      %p41 = por %p39, %p40
      %p42 = scmp.ne.s32.totalorder %s31, %s32
      %p43 = scmp.eq.s32.totalorder %s23, 0
      %p44 = por %p42, %p43
      %p45 = scmp.ne.s32.totalorder %s31, %s32
      %p46 = scmp.eq.s32.totalorder %s24, 1
      %p47 = por %p45, %p46
      %p49 = scmp.ne.s32.totalorder %s32, %s48
      %p50 = scmp.eq.s32.totalorder %s24, 0
      %p51 = por %p49, %p50
      %s53 = sadd.s32 %s52, 1
      %p56 = scmp.eq.s32.totalorder %s18, 1
      %p57 = scmp.ne.s32.totalorder %s52, %s54
      %p58 = scmp.eq.s32.totalorder %s18, 0
      %p59 = por %p57, %p58
      %p60 = scmp.ne.s32.totalorder %s52, %s54
      %p61 = scmp.eq.s32.totalorder %s23, 1
      %p62 = por %p60, %p61
      %p63 = scmp.ne.s32.totalorder %s54, %s55
      %p64 = scmp.eq.s32.totalorder %s23, 0
      %p65 = por %p63, %p64
      %p66 = scmp.ne.s32.totalorder %s54, %s55
      %p67 = scmp.eq.s32.totalorder %s24, 1
      %p68 = por %p66, %p67
      %p70 = scmp.ne.s32.totalorder %s55, %s69
      %p71 = scmp.eq.s32.totalorder %s24, 0
      %p72 = por %p70, %p71
      %s74 = sadd.s32 %s73, 1
      %p77 = scmp.eq.s32.totalorder %s18, 1
      %p78 = scmp.ne.s32.totalorder %s73, %s75
      %p79 = scmp.eq.s32.totalorder %s18, 0
      %p80 = por %p78, %p79
      %p81 = scmp.ne.s32.totalorder %s73, %s75
      %p82 = scmp.eq.s32.totalorder %s23, 1
      %p83 = por %p81, %p82
      %p84 = scmp.ne.s32.totalorder %s75, %s76
      %p85 = scmp.eq.s32.totalorder %s23, 0
      %p86 = por %p84, %p85
      %p87 = scmp.ne.s32.totalorder %s75, %s76
      %p88 = scmp.eq.s32.totalorder %s24, 1
      %p89 = por %p87, %p88
      %p91 = scmp.ne.s32.totalorder %s76, %s90
      %p92 = scmp.eq.s32.totalorder %s24, 0
      %p93 = por %p91, %p92
      %s95 = sadd.s32 %s94, 1
      %p98 = scmp.eq.s32.totalorder %s18, 1
      %p99 = scmp.ne.s32.totalorder %s94, %s96
      %p100 = scmp.eq.s32.totalorder %s18, 0
      %p101 = por %p99, %p100
      %p102 = scmp.ne.s32.totalorder %s94, %s96
      %p103 = scmp.eq.s32.totalorder %s23, 1
      %p104 = por %p102, %p103
      %p105 = scmp.ne.s32.totalorder %s96, %s97
      %p106 = scmp.eq.s32.totalorder %s23, 0
      %p107 = por %p105, %p106
      %p108 = scmp.ne.s32.totalorder %s96, %s97
      %p109 = scmp.eq.s32.totalorder %s24, 1
      %p110 = por %p108, %p109
      %p112 = scmp.ne.s32.totalorder %s97, %s111
      %p113 = scmp.eq.s32.totalorder %s24, 0
      %p114 = por %p112, %p113
      %s116 = sadd.s32 %s115, 1
      %p119 = scmp.eq.s32.totalorder %s18, 1
      %p120 = scmp.ne.s32.totalorder %s115, %s117
      %p121 = scmp.eq.s32.totalorder %s18, 0
      %p122 = por %p120, %p121
      %p123 = scmp.ne.s32.totalorder %s115, %s117
      %p124 = scmp.eq.s32.totalorder %s23, 1
      %p125 = por %p123, %p124
      %p126 = scmp.ne.s32.totalorder %s117, %s118
      %p127 = scmp.eq.s32.totalorder %s23, 0
      %p128 = por %p126, %p127
      %p129 = scmp.ne.s32.totalorder %s117, %s118
      %p130 = scmp.eq.s32.totalorder %s24, 1
      %p131 = por %p129, %p130
      %p133 = scmp.ne.s32.totalorder %s118, %s132
      %p134 = scmp.eq.s32.totalorder %s24, 0
      %p135 = por %p133, %p134
      %s136 = ssub.s32 %s18, %s25
      %p137 = scmp.eq.s32.totalorder %s136, 0
      %s139 = sadd.s32 %s138, 1
      %s140 = scalar_select %p137, %s138, %s139
      %p143 = pneg %p137
      %p144 = scmp.eq.s32.totalorder %s18, 1
      %p145 = por %p143, %p144
      %p146 = scmp.ne.s32.totalorder %s138, %s141
      %p147 = scmp.eq.s32.totalorder %s18, 0
      %p148 = por %p146, %p147
      %p149 = scmp.ne.s32.totalorder %s138, %s141
      %p150 = scmp.eq.s32.totalorder %s23, 1
      %p151 = por %p149, %p150
      %p152 = scmp.ne.s32.totalorder %s141, %s142
      %p153 = scmp.eq.s32.totalorder %s23, 0
      %p154 = por %p152, %p153
      %p155 = scmp.ne.s32.totalorder %s141, %s142
      %p156 = scmp.eq.s32.totalorder %s24, 1
      %p157 = por %p155, %p156
      %p159 = scmp.ne.s32.totalorder %s142, %s158
      %p160 = scmp.eq.s32.totalorder %s24, 0
      %p161 = por %p159, %p160
      %p162 = scmp.le.s32.totalorder 1, %s18
      %p163 = scmp.lt.s32.totalorder %s18, 3
      %p164 = pnand %p162, %p163
      %p165 = pneg %p164
      // Predicated region
      $region9: #{tpu_custom_call.1} parent=5 // pred_check
        _
      $region10: #{tpu_custom_call.1} parent=5 // pred_check_branch
        %167 = sbr.rel (%p164) target = $region12
      $region11: #{tpu_custom_call.1} parent=5 // pred_region
        %s168 = ssub.s32 %s18, 1
        // Predicated region
        $region13: #{tpu_custom_call.1} parent=11 // pred_check
          %p169 = pneg %p65
        $region14: #{tpu_custom_call.1} parent=11 // pred_check_branch
          %171 = sbr.rel (%p169) target = $region16
        $region15: #{tpu_custom_call.1} parent=11 // pred_region
          %173 = vsyncadd [#allocation6], 0
          %s174 = sshll.u32 %s1, 4
          %s175 = int_to_ptr.hbm [resolvable:$true] %s174
          %s176 = sshll.u32 [#allocation5], 4
          %s177 = int_to_ptr.vmem [resolvable:$true] %s176
          %182 = dma.hbm_to_vmem [thread:$0]  %s175, 2048, %s177, [#allocation6], 128, 128, 8
        $region16: #{tpu_custom_call.1} parent=11 // pred_fallthru
          _
        // Predicated region
        $region17: #{tpu_custom_call.1} parent=11 // pred_check
          %p183 = pneg %p86
        $region18: #{tpu_custom_call.1} parent=11 // pred_check_branch
          %185 = sbr.rel (%p183) target = $region20
        $region19: #{tpu_custom_call.1} parent=11 // pred_region
          _
        $region20: #{tpu_custom_call.1} parent=11 // pred_fallthru
          _
        // Predicated region
        $region21: #{tpu_custom_call.1} parent=11 // pred_check
          %p186 = pneg %p107
        $region22: #{tpu_custom_call.1} parent=11 // pred_check_branch
          %188 = sbr.rel (%p186) target = $region24
        $region23: #{tpu_custom_call.1} parent=11 // pred_region
          _
        $region24: #{tpu_custom_call.1} parent=11 // pred_fallthru
          _
        // Predicated region
        $region25: #{tpu_custom_call.1} parent=11 // pred_check
          %p189 = pneg %p128
        $region26: #{tpu_custom_call.1} parent=11 // pred_check_branch
          %191 = sbr.rel (%p189) target = $region28
        $region27: #{tpu_custom_call.1} parent=11 // pred_region
          _
        $region28: #{tpu_custom_call.1} parent=11 // pred_fallthru
          _
      $region12: #{tpu_custom_call.1} parent=5 // pred_fallthru
        _
      %p192 = scmp.lt.s32.totalorder %s18, 2
      // Predicated region
      $region29: #{tpu_custom_call.1} parent=5 // pred_check
        %p193 = pneg %p192
      $region30: #{tpu_custom_call.1} parent=5 // pred_check_branch
        %195 = sbr.rel (%p193) target = $region32
      $region31: #{tpu_custom_call.1} parent=5 // pred_region
        // Predicated region
        $region33: #{tpu_custom_call.1} parent=31 // pred_check
          %p196 = pneg %p38
        $region34: #{tpu_custom_call.1} parent=31 // pred_check_branch
          %198 = sbr.rel (%p196) target = $region36
        $region35: #{tpu_custom_call.1} parent=31 // pred_region
          %s199 = sand.u32 %s28, 1
          %s200 = scalar_lea.sflag [#allocation3], %s199
          %s201 = sand.u32 %s28, 1
          %s202 = smul.addr %s201, 8
          %s203 = scalar_lea.vmem [#allocation2], %s202
          %205 = vsyncadd %s200, 0
          %s206 = smul.addr %s18, 8
          %s207 = scalar_lea.hbm %s0, %s206
          %s209 = sshll.u32 %s207, 4
          %s210 = int_to_ptr.hbm [resolvable:$true] %s209
          %s211 = sshll.u32 %s203, 4
          %s212 = int_to_ptr.vmem [resolvable:$true] %s211
          %214 = dma.hbm_to_vmem [thread:$0]  %s210, 128, %s212, %s200
        $region36: #{tpu_custom_call.1} parent=31 // pred_fallthru
          _
      $region32: #{tpu_custom_call.1} parent=5 // pred_fallthru
        _
      %p215 = scmp.le.s32.totalorder 1, %s18
      %p216 = scmp.lt.s32.totalorder %s18, 3
      %p217 = pnand %p215, %p216
      %p218 = pneg %p217
      // Predicated region
      $region37: #{tpu_custom_call.1} parent=5 // pred_check
        _
      $region38: #{tpu_custom_call.1} parent=5 // pred_check_branch
        %220 = sbr.rel (%p217) target = $region40
      $region39: #{tpu_custom_call.1} parent=5 // pred_region
        %s221 = ssub.s32 %s18, 1
        %s222 = sand.u32 %s31, 1
        %s223 = scalar_lea.sflag [#allocation3], %s222
        %s224 = sand.u32 %s31, 1
        %s225 = smul.addr %s224, 8
        %s226 = scalar_lea.vmem [#allocation2], %s225
        // Predicated region
        $region41: #{tpu_custom_call.1} parent=39 // pred_check
          %p227 = pneg %p44
        $region42: #{tpu_custom_call.1} parent=39 // pred_check_branch
          %229 = sbr.rel (%p227) target = $region44
        $region43: #{tpu_custom_call.1} parent=39 // pred_region
          %231 = dma.done %s223, 128
        $region44: #{tpu_custom_call.1} parent=39 // pred_fallthru
          _
        // Predicated region
        $region45: #{tpu_custom_call.1} parent=39 // pred_check
          %p232 = pneg %p65
        $region46: #{tpu_custom_call.1} parent=39 // pred_check_branch
          %234 = sbr.rel (%p232) target = $region48
        $region47: #{tpu_custom_call.1} parent=39 // pred_region
          %236 = dma.done [#allocation6], 2048
        $region48: #{tpu_custom_call.1} parent=39 // pred_fallthru
          _
        %s237 = sand.u32 %s31, 1
        %s238 = scalar_lea.sflag [#allocation3], %s237
        %s239 = sand.u32 %s31, 1
        %s240 = smul.addr %s239, 8
        %s241 = scalar_lea.vmem [#allocation2], %s240
        %p242 = pneg %p44
        %p243 = pneg %p41
        %p244 = pneg %p65
        %p245 = pneg %p62
        %p246 = pneg %p86
        %p247 = pneg %p83
        %p248 = pneg %p107
        %p249 = pneg %p104
        %p250 = pneg %p128
        %p251 = pneg %p125
        %p252 = pneg %p154
        %p253 = pneg %p151
        %s254 = sand.u32 %s141, 1
        %s255 = scalar_lea.sflag [#allocation4], %s254
        %s256 = sand.u32 %s141, 1
        %s257 = smul.addr %s256, 8
        %s258 = scalar_lea.vmem [#allocation7], %s257
        %v259 = vld [vmem:[%s226] sm:$0xff]
        %v260 = vld [vmem:[#allocation5] sm:$0xff]
        %v261 = vld [vmem:[#allocation5 + $0x8] sm:$0xff]
        %v262 = vld [vmem:[#allocation5 + $0x10] sm:$0xff]
        %v263 = vld [vmem:[#allocation5 + $0x18] sm:$0xff]
        %v264 = vld [vmem:[#allocation5 + $0x20] sm:$0xff]
        %v265 = vld [vmem:[#allocation5 + $0x28] sm:$0xff]
        %v266 = vld [vmem:[#allocation5 + $0x30] sm:$0xff]
        %v267 = vld [vmem:[#allocation5 + $0x38] sm:$0xff]
        %v268 = vld [vmem:[#allocation5 + $0x40] sm:$0xff]
        %v269 = vld [vmem:[#allocation5 + $0x48] sm:$0xff]
        %v270 = vld [vmem:[#allocation5 + $0x50] sm:$0xff]
        %v271 = vld [vmem:[#allocation5 + $0x58] sm:$0xff]
        %v272 = vld [vmem:[#allocation5 + $0x60] sm:$0xff]
        %v273 = vld [vmem:[#allocation5 + $0x68] sm:$0xff]
        %v274 = vld [vmem:[#allocation5 + $0x70] sm:$0xff]
        %v275 = vld [vmem:[#allocation5 + $0x78] sm:$0xff]
        %v276 = vld [vmem:[%s2] sm:$0x1]
        %v278 = vperm.slane %v276, 0
        %280 = vmatpush.msra.mxu0 %v275
        %281 = vmatpush.msra.mxu0 %v274
        %282 = vmatpush.msra.mxu0 %v273
        %283 = vmatpush.msra.mxu0 %v272
        %284 = vmatpush.msra.mxu0 %v271
        %285 = vmatpush.msra.mxu0 %v270
        %286 = vmatpush.msra.mxu0 %v269
        %287 = vmatpush.msra.mxu0 %v268
        %288 = vmatpush.msra.mxu0 %v267
        %289 = vmatpush.msra.mxu0 %v266
        %290 = vmatpush.msra.mxu0 %v265
        %291 = vmatpush.msra.mxu0 %v264
        %292 = vmatpush.msra.mxu0 %v263
        %293 = vmatpush.msra.mxu0 %v262
        %294 = vmatpush.msra.mxu0 %v261
        %295 = vmatpush.msra.mxu0 %v260
        %296 = vmatmul.f32.gmra.mxu0 %v259
        %v297 = vpop.f32.mrf.mxu0
        %v298 = vadd.f32 %v278, %v297
        %299 = vdwg.mxu0
        %v300 = vand.u32 2147483647, %v298
        %v301 = vmul.f32 %v300, 0.70710677
        %v302 = vmul.f32 %v301, 0.3275911
        %v303 = vadd.f32 %v302, 1.0
        %v304 = vrcp.pop %v303
        %v305 = vmul.f32 %v303, %v304
        %v306 = vsub.f32 1.0, %v305
        %v307 = vmul.f32 %v304, %v306
        %v308 = vadd.f32 %v304, %v307
        %vm309 = vweird.f32 %v303
        %vm310 = vweird.f32 %v304
        %vm311 = vmor %vm309, %vm310
        %v312 = vsel %vm311, %v304, %v308
        %v313 = vand.u32 2147483647, %v303
        %vm314 = vcmp.eq.f32.partialorder %v313, 8.507059e+37
        %v315 = vand.u32 %v303, 2147483648
        %v316 = vor.u32 1.1754944e-38, %v315
        %v317 = vsel %vm314, %v316, %v312
        %v318 = vmul.f32 1.0, %v317
        %v319 = vmul.f32 %v318, 1.0614054
        %v320 = vsub.f32 %v319, 1.4531521
        %v321 = vmul.f32 %v320, %v318
        %v322 = vadd.f32 %v321, 1.4214138
        %v323 = vmul.f32 %v322, %v318
        %v324 = vsub.f32 %v323, 0.28449672
        %v325 = vmul.f32 %v324, %v318
        %v326 = vadd.f32 %v325, 0.2548296
        %v327 = vmul.f32 %v326, %v318
        %v328 = vmul.f32 %v301, %v301
        %v329 = vsub.f32 0.0, %v328
        %v330 = vmul.f32 %v329, 1.442695
        %v331 = vpow.pop %v330
        %v332 = vmul.f32 %v327, %v331
        %v333 = vsub.f32 1.0, %v332
        %v334 = vmul.f32 %v300, %v333
        %v335 = vadd.f32 %v298, %v334
        %v336 = vmul.f32 %v335, 0.5
        %337 = vadd.xlane.f32.xlu0 %v336
        %v338 = vpop.xlane.xlu0 %337
        %v339 = vmul.f32 %v336, %v336
        %340 = vadd.xlane.f32.xlu0 %v339
        %v341 = vpop.xlane.xlu0 %340
        %v342 = vmul.f32 %v338, 0.03125
        %v343 = vmul.f32 %v341, 0.03125
        %v344 = vmul.f32 %v342, %v342
        %v345 = vsub.f32 %v343, %v344
        %v346 = vmax.f32 %v345, 0.0
        %v347 = vsub.f32 %v336, %v342
        %v348 = vadd.f32 %v346, 1e-12
        %v349 = vrsqrt.pop %v348
        %v350 = vmul.f32 %v349, %v348
        %v351 = vmul.f32 %v350, %v349
        %v352 = vmul.f32 0.5, %v351
        %v353 = vsub.f32 1.5, %v352
        %v354 = vmul.f32 %v349, %v353
        %vm355 = vweird.f32 %v348
        %vm356 = vweird.f32 %v349
        %vm357 = vmor %vm355, %vm356
        %v358 = vsel %vm357, %v349, %v354
        %v359 = vmul.f32 %v347, %v358
        %v360 = vld [vmem:[%s3] sm:$0x1]
        %v362 = vperm.slane %v360, 0
        %v364 = vmul.f32 %v362, %v359
        %v365 = vld [vmem:[%s4] sm:$0x1]
        %v367 = vperm.slane %v365, 0
        %v369 = vadd.f32 %v364, %v367
        %370 = vst [vmem:[%s258] sm:$0xff] %v369
        %s371 = sand.u32 %s141, 1
        %s372 = scalar_lea.sflag [#allocation4], %s371
        %s373 = sand.u32 %s141, 1
        %s374 = smul.addr %s373, 8
        %s375 = scalar_lea.vmem [#allocation7], %s374
        // Predicated region
        $region49: #{tpu_custom_call.1} parent=39 // pred_check
          %p376 = pneg %p151
        $region50: #{tpu_custom_call.1} parent=39 // pred_check_branch
          %378 = sbr.rel (%p376) target = $region52
        $region51: #{tpu_custom_call.1} parent=39 // pred_region
          %380 = vsyncadd %s372, 0
          %s381 = smul.addr %s23, 8
          %s382 = scalar_lea.hbm %s5, %s381
          %s384 = sshll.u32 %s375, 4
          %s385 = int_to_ptr.vmem [resolvable:$true] %s384
          %s386 = sshll.u32 %s382, 4
          %s387 = int_to_ptr.hbm [resolvable:$true] %s386
          %389 = dma.vmem_to_hbm [thread:$0]  %s385, 128, %s387, %s372
        $region52: #{tpu_custom_call.1} parent=39 // pred_fallthru
          _
      $region40: #{tpu_custom_call.1} parent=5 // pred_fallthru
        _
      %p390 = scmp.le.s32.totalorder 2, %s18
      // Predicated region
      $region53: #{tpu_custom_call.1} parent=5 // pred_check
        %p391 = pneg %p390
      $region54: #{tpu_custom_call.1} parent=5 // pred_check_branch
        %393 = sbr.rel (%p391) target = $region56
      $region55: #{tpu_custom_call.1} parent=5 // pred_region
        %s394 = ssub.s32 %s18, 2
        // Predicated region
        $region57: #{tpu_custom_call.1} parent=55 // pred_check
          %p395 = pneg %p157
        $region58: #{tpu_custom_call.1} parent=55 // pred_check_branch
          %397 = sbr.rel (%p395) target = $region60
        $region59: #{tpu_custom_call.1} parent=55 // pred_region
          %s398 = sand.u32 %s142, 1
          %s399 = scalar_lea.sflag [#allocation4], %s398
          %s400 = sand.u32 %s142, 1
          %s401 = smul.addr %s400, 8
          %s402 = scalar_lea.vmem [#allocation7], %s401
          %404 = dma.done %s399, 128
        $region60: #{tpu_custom_call.1} parent=55 // pred_fallthru
          _
      $region56: #{tpu_custom_call.1} parent=5 // pred_fallthru
        _
    $region6: #{tpu_custom_call.1} parent=1 // loop_footer
      %s22 = sadd.s32 1, %s18
    $region7: #{tpu_custom_call.1} parent=1 // loop_footer_branch
      %17 = sbr.rel target = $region3
    $region8: #{tpu_custom_call.1} parent=1 // loop_exit
      _
    %405 = vsyncpa [#allocation3], 1
    %s406 = scalar_lea.sflag [#allocation3], 1
    %407 = vsyncpa %s406, 1
    %408 = vsyncpa [#allocation6], 1
    %409 = vsyncpa [#allocation4], 1
    %s410 = scalar_lea.sflag [#allocation4], 1
    %411 = vsyncpa %s410, 1

// kernel: tpu_custom_call.1
$region0: #{tpu_custom_call.1}
  #allocation0 [shape = 'u32[]', space=smem, size = 0x4, offset = 0x4, fixed_abs, tag = 'smem constant byte address 0x4 - core index']
  #allocation1 [shape = 'u32[72,128]{1,0:T(1,128)}', space=vmem, size = 0x9000, scoped, tag = 'internal scratch']
  %s0 = inlined_call_operand.hbm [shape: f32[16,128], index: 0, kind: input, shape index: {}]
  %s1 = inlined_call_operand.hbm [shape: f32[128,128], index: 1, kind: input, shape index: {}]
  %s2 = inlined_call_operand.vmem [shape: f32[1,128], index: 2, kind: input, shape index: {}]
  %s3 = inlined_call_operand.vmem [shape: f32[1,128], index: 3, kind: input, shape index: {}]
  %s4 = inlined_call_operand.vmem [shape: f32[1,128], index: 4, kind: input, shape index: {}]
  %s5 = inlined_call_operand.hbm [shape: f32[16,128], index: 5, kind: output, shape index: {}]
  %s6 = sld [smem:[#allocation0]]
  $region61: #{tpu_custom_call.1} parent=0
    _
  %s8 = ssub.s32 1, %s6
  %s9 = scalar_select 0, %s8, %s6
  $region1: #{tpu_custom_call.1} parent=0
    #allocation2 [shape = 'u8[8192]{0}', space=vmem, size = 0x2000, scoped, tag = 'input window, operand 0']
    #allocation3 [shape = 's32[2]{0}', space=sflag, size = 0x8, scoped, tag = 'scoped memory for tpu_custom_call.1']
    #allocation4 [shape = 's32[2]{0}', space=sflag, size = 0x8, scoped, tag = 'scoped memory for tpu_custom_call.1']
    #allocation5 [shape = 'u8[65536]{0}', space=vmem, size = 0x10000, scoped, tag = 'input window, operand 1, single buffered']
    #allocation6 [shape = 's32[1]{0}', space=sflag, size = 0x4, scoped, tag = 'scoped memory for tpu_custom_call.1']
    #allocation7 [shape = 'u8[8192]{0}', space=vmem, size = 0x2000, scoped, tag = 'output window, operand 0']
    %10 = vsyncpa [#allocation3], 0
    %s11 = scalar_lea.sflag [#allocation3], 1
    %12 = vsyncpa %s11, 0
    %13 = vsyncpa [#allocation6], 0
    %14 = vsyncpa [#allocation4], 0
    %s15 = scalar_lea.sflag [#allocation4], 1
    %16 = vsyncpa %s15, 0
    loop: start=0, step=1, limit=4
    $region2: #{tpu_custom_call.1} parent=1 // loop_pre_header
      _
    $region3: #{tpu_custom_call.1} parent=1 // loop_header
      %s18 = sphi 0, %s22
      %p19 = scmp.ge.s32.totalorder %s18, 4
      %s28 = sphi 0, %s30
      %s31 = sphi 0, %s28
      %s32 = sphi 0, %s31
      %s48 = sphi 0, %s32
      %s52 = sphi 0, %s52
      %s54 = sphi 0, %s52
      %s55 = sphi 0, %s54
      %s69 = sphi 0, %s55
      %s73 = sphi 0, %s73
      %s75 = sphi 0, %s73
      %s76 = sphi 0, %s75
      %s90 = sphi 0, %s76
      %s94 = sphi 0, %s94
      %s96 = sphi 0, %s94
      %s97 = sphi 0, %s96
      %s111 = sphi 0, %s97
      %s115 = sphi 0, %s115
      %s117 = sphi 0, %s115
      %s118 = sphi 0, %s117
      %s132 = sphi 0, %s118
      %s138 = sphi 0, %s140
      %s141 = sphi 0, %s138
      %s142 = sphi 0, %s141
      %s158 = sphi 0, %s142
    $region4: #{tpu_custom_call.1} parent=1 // loop_header_branch
      %21 = sbr.rel (%p19) target = $region8
    $region5: #{tpu_custom_call.1} parent=1 // loop_body
      %s23 = ssub.s32 %s18, 1
      %s24 = ssub.s32 %s18, 2
      %s25 = sadd.s32 %s18, 1
      %s26 = ssub.s32 %s18, %s25
      %p27 = scmp.eq.s32.totalorder %s26, 0
      %s29 = sadd.s32 %s28, 1
      %s30 = scalar_select %p27, %s28, %s29
      %p33 = pneg %p27
      %p34 = scmp.eq.s32.totalorder %s18, 1
      %p35 = por %p33, %p34
      %p36 = scmp.ne.s32.totalorder %s28, %s31
      %p37 = scmp.eq.s32.totalorder %s18, 0
      %p38 = por %p36, %p37
      %p39 = scmp.ne.s32.totalorder %s28, %s31
      %p40 = scmp.eq.s32.totalorder %s23, 1
      %p41 = por %p39, %p40
      %p42 = scmp.ne.s32.totalorder %s31, %s32
      %p43 = scmp.eq.s32.totalorder %s23, 0
      %p44 = por %p42, %p43
      %p45 = scmp.ne.s32.totalorder %s31, %s32
      %p46 = scmp.eq.s32.totalorder %s24, 1
      %p47 = por %p45, %p46
      %p49 = scmp.ne.s32.totalorder %s32, %s48
      %p50 = scmp.eq.s32.totalorder %s24, 0
      %p51 = por %p49, %p50
      %s53 = sadd.s32 %s52, 1
      %p56 = scmp.eq.s32.totalorder %s18, 1
      %p57 = scmp.ne.s32.totalorder %s52, %s54
      %p58 = scmp.eq.s32.totalorder %s18, 0
      %p59 = por %p57, %p58
      %p60 = scmp.ne.s32.totalorder %s52, %s54
      %p61 = scmp.eq.s32.totalorder %s23, 1
      %p62 = por %p60, %p61
      %p63 = scmp.ne.s32.totalorder %s54, %s55
      %p64 = scmp.eq.s32.totalorder %s23, 0
      %p65 = por %p63, %p64
      %p66 = scmp.ne.s32.totalorder %s54, %s55
      %p67 = scmp.eq.s32.totalorder %s24, 1
      %p68 = por %p66, %p67
      %p70 = scmp.ne.s32.totalorder %s55, %s69
      %p71 = scmp.eq.s32.totalorder %s24, 0
      %p72 = por %p70, %p71
      %s74 = sadd.s32 %s73, 1
      %p77 = scmp.eq.s32.totalorder %s18, 1
      %p78 = scmp.ne.s32.totalorder %s73, %s75
      %p79 = scmp.eq.s32.totalorder %s18, 0
      %p80 = por %p78, %p79
      %p81 = scmp.ne.s32.totalorder %s73, %s75
      %p82 = scmp.eq.s32.totalorder %s23, 1
      %p83 = por %p81, %p82
      %p84 = scmp.ne.s32.totalorder %s75, %s76
      %p85 = scmp.eq.s32.totalorder %s23, 0
      %p86 = por %p84, %p85
      %p87 = scmp.ne.s32.totalorder %s75, %s76
      %p88 = scmp.eq.s32.totalorder %s24, 1
      %p89 = por %p87, %p88
      %p91 = scmp.ne.s32.totalorder %s76, %s90
      %p92 = scmp.eq.s32.totalorder %s24, 0
      %p93 = por %p91, %p92
      %s95 = sadd.s32 %s94, 1
      %p98 = scmp.eq.s32.totalorder %s18, 1
      %p99 = scmp.ne.s32.totalorder %s94, %s96
      %p100 = scmp.eq.s32.totalorder %s18, 0
      %p101 = por %p99, %p100
      %p102 = scmp.ne.s32.totalorder %s94, %s96
      %p103 = scmp.eq.s32.totalorder %s23, 1
      %p104 = por %p102, %p103
      %p105 = scmp.ne.s32.totalorder %s96, %s97
      %p106 = scmp.eq.s32.totalorder %s23, 0
      %p107 = por %p105, %p106
      %p108 = scmp.ne.s32.totalorder %s96, %s97
      %p109 = scmp.eq.s32.totalorder %s24, 1
      %p110 = por %p108, %p109
      %p112 = scmp.ne.s32.totalorder %s97, %s111
      %p113 = scmp.eq.s32.totalorder %s24, 0
      %p114 = por %p112, %p113
      %s116 = sadd.s32 %s115, 1
      %p119 = scmp.eq.s32.totalorder %s18, 1
      %p120 = scmp.ne.s32.totalorder %s115, %s117
      %p121 = scmp.eq.s32.totalorder %s18, 0
      %p122 = por %p120, %p121
      %p123 = scmp.ne.s32.totalorder %s115, %s117
      %p124 = scmp.eq.s32.totalorder %s23, 1
      %p125 = por %p123, %p124
      %p126 = scmp.ne.s32.totalorder %s117, %s118
      %p127 = scmp.eq.s32.totalorder %s23, 0
      %p128 = por %p126, %p127
      %p129 = scmp.ne.s32.totalorder %s117, %s118
      %p130 = scmp.eq.s32.totalorder %s24, 1
      %p131 = por %p129, %p130
      %p133 = scmp.ne.s32.totalorder %s118, %s132
      %p134 = scmp.eq.s32.totalorder %s24, 0
      %p135 = por %p133, %p134
      %s136 = ssub.s32 %s18, %s25
      %p137 = scmp.eq.s32.totalorder %s136, 0
      %s139 = sadd.s32 %s138, 1
      %s140 = scalar_select %p137, %s138, %s139
      %p143 = pneg %p137
      %p144 = scmp.eq.s32.totalorder %s18, 1
      %p145 = por %p143, %p144
      %p146 = scmp.ne.s32.totalorder %s138, %s141
      %p147 = scmp.eq.s32.totalorder %s18, 0
      %p148 = por %p146, %p147
      %p149 = scmp.ne.s32.totalorder %s138, %s141
      %p150 = scmp.eq.s32.totalorder %s23, 1
      %p151 = por %p149, %p150
      %p152 = scmp.ne.s32.totalorder %s141, %s142
      %p153 = scmp.eq.s32.totalorder %s23, 0
      %p154 = por %p152, %p153
      %p155 = scmp.ne.s32.totalorder %s141, %s142
      %p156 = scmp.eq.s32.totalorder %s24, 1
      %p157 = por %p155, %p156
      %p159 = scmp.ne.s32.totalorder %s142, %s158
      %p160 = scmp.eq.s32.totalorder %s24, 0
      %p161 = por %p159, %p160
      %p162 = scmp.le.s32.totalorder 1, %s18
      %p163 = scmp.lt.s32.totalorder %s18, 3
      %p164 = pnand %p162, %p163
      %p165 = pneg %p164
      // Predicated region
      $region9: #{tpu_custom_call.1} parent=5 // pred_check
        _
      $region10: #{tpu_custom_call.1} parent=5 // pred_check_branch
        %167 = sbr.rel (%p164) target = $region12
      $region11: #{tpu_custom_call.1} parent=5 // pred_region
        %s168 = ssub.s32 %s18, 1
        // Predicated region
        $region13: #{tpu_custom_call.1} parent=11 // pred_check
          %p169 = pneg %p65
        $region14: #{tpu_custom_call.1} parent=11 // pred_check_branch
          %171 = sbr.rel (%p169) target = $region16
        $region15: #{tpu_custom_call.1} parent=11 // pred_region
          %173 = vsyncadd [#allocation6], 0
          %s174 = sshll.u32 %s1, 4
          %s175 = int_to_ptr.hbm [resolvable:$true] %s174
          %s176 = sshll.u32 [#allocation5], 4
          %s177 = int_to_ptr.vmem [resolvable:$true] %s176
          %182 = dma.hbm_to_vmem [thread:$0]  %s175, 2048, %s177, [#allocation6], 128, 128, 8
        $region16: #{tpu_custom_call.1} parent=11 // pred_fallthru
          _
        // Predicated region
        $region17: #{tpu_custom_call.1} parent=11 // pred_check
          %p183 = pneg %p86
        $region18: #{tpu_custom_call.1} parent=11 // pred_check_branch
          %185 = sbr.rel (%p183) target = $region20
        $region19: #{tpu_custom_call.1} parent=11 // pred_region
          _
        $region20: #{tpu_custom_call.1} parent=11 // pred_fallthru
          _
        // Predicated region
        $region21: #{tpu_custom_call.1} parent=11 // pred_check
          %p186 = pneg %p107
        $region22: #{tpu_custom_call.1} parent=11 // pred_check_branch
          %188 = sbr.rel (%p186) target = $region24
        $region23: #{tpu_custom_call.1} parent=11 // pred_region
          _
        $region24: #{tpu_custom_call.1} parent=11 // pred_fallthru
          _
        // Predicated region
        $region25: #{tpu_custom_call.1} parent=11 // pred_check
          %p189 = pneg %p128
        $region26: #{tpu_custom_call.1} parent=11 // pred_check_branch
          %191 = sbr.rel (%p189) target = $region28
        $region27: #{tpu_custom_call.1} parent=11 // pred_region
          _
        $region28: #{tpu_custom_call.1} parent=11 // pred_fallthru
          _
      $region12: #{tpu_custom_call.1} parent=5 // pred_fallthru
        _
      %p192 = scmp.lt.s32.totalorder %s18, 2
      // Predicated region
      $region29: #{tpu_custom_call.1} parent=5 // pred_check
        %p193 = pneg %p192
      $region30: #{tpu_custom_call.1} parent=5 // pred_check_branch
        %195 = sbr.rel (%p193) target = $region32
      $region31: #{tpu_custom_call.1} parent=5 // pred_region
        // Predicated region
        $region33: #{tpu_custom_call.1} parent=31 // pred_check
          %p196 = pneg %p38
        $region34: #{tpu_custom_call.1} parent=31 // pred_check_branch
          %198 = sbr.rel (%p196) target = $region36
        $region35: #{tpu_custom_call.1} parent=31 // pred_region
          %s199 = sand.u32 %s28, 1
          %s200 = scalar_lea.sflag [#allocation3], %s199
          %s201 = sand.u32 %s28, 1
          %s202 = smul.addr %s201, 8
          %s203 = scalar_lea.vmem [#allocation2], %s202
          %205 = vsyncadd %s200, 0
          %s206 = smul.addr %s18, 8
          %s207 = scalar_lea.hbm %s0, %s206
          %s209 = sshll.u32 %s207, 4
          %s210 = int_to_ptr.hbm [resolvable:$true] %s209
          %s211 = sshll.u32 %s203, 4
          %s212 = int_to_ptr.vmem [resolvable:$true] %s211
          %214 = dma.hbm_to_vmem [thread:$0]  %s210, 128, %s212, %s200
        $region36: #{tpu_custom_call.1} parent=31 // pred_fallthru
          _
      $region32: #{tpu_custom_call.1} parent=5 // pred_fallthru
        _
      %p215 = scmp.le.s32.totalorder 1, %s18
      %p216 = scmp.lt.s32.totalorder %s18, 3
      %p217 = pnand %p215, %p216
      %p218 = pneg %p217
      // Predicated region
      $region37: #{tpu_custom_call.1} parent=5 // pred_check
        _
      $region38: #{tpu_custom_call.1} parent=5 // pred_check_branch
        %220 = sbr.rel (%p217) target = $region40
      $region39: #{tpu_custom_call.1} parent=5 // pred_region
        %s221 = ssub.s32 %s18, 1
        %s222 = sand.u32 %s31, 1
        %s223 = scalar_lea.sflag [#allocation3], %s222
        %s224 = sand.u32 %s31, 1
        %s225 = smul.addr %s224, 8
        %s226 = scalar_lea.vmem [#allocation2], %s225
        // Predicated region
        $region41: #{tpu_custom_call.1} parent=39 // pred_check
          %p227 = pneg %p44
        $region42: #{tpu_custom_call.1} parent=39 // pred_check_branch
          %229 = sbr.rel (%p227) target = $region44
        $region43: #{tpu_custom_call.1} parent=39 // pred_region
          %231 = dma.done %s223, 128
        $region44: #{tpu_custom_call.1} parent=39 // pred_fallthru
          _
        // Predicated region
        $region45: #{tpu_custom_call.1} parent=39 // pred_check
          %p232 = pneg %p65
        $region46: #{tpu_custom_call.1} parent=39 // pred_check_branch
          %234 = sbr.rel (%p232) target = $region48
        $region47: #{tpu_custom_call.1} parent=39 // pred_region
          %236 = dma.done [#allocation6], 2048
        $region48: #{tpu_custom_call.1} parent=39 // pred_fallthru
          _
        %s237 = sand.u32 %s31, 1
        %s238 = scalar_lea.sflag [#allocation3], %s237
        %s239 = sand.u32 %s31, 1
        %s240 = smul.addr %s239, 8
        %s241 = scalar_lea.vmem [#allocation2], %s240
        %p242 = pneg %p44
        %p243 = pneg %p41
        %p244 = pneg %p65
        %p245 = pneg %p62
        %p246 = pneg %p86
        %p247 = pneg %p83
        %p248 = pneg %p107
        %p249 = pneg %p104
        %p250 = pneg %p128
        %p251 = pneg %p125
        %p252 = pneg %p154
        %p253 = pneg %p151
        %s254 = sand.u32 %s141, 1
        %s255 = scalar_lea.sflag [#allocation4], %s254
        %s256 = sand.u32 %s141, 1
        %s257 = smul.addr %s256, 8
        %s258 = scalar_lea.vmem [#allocation7], %s257
        %v259 = vld [vmem:[%s226] sm:$0xff]
        %v260 = vld [vmem:[#allocation5] sm:$0xff]
        %v261 = vld [vmem:[#allocation5 + $0x8] sm:$0xff]
        %v262 = vld [vmem:[#allocation5 + $0x10] sm:$0xff]
        %v263 = vld [vmem:[#allocation5 + $0x18] sm:$0xff]
        %v264 = vld [vmem:[#allocation5 + $0x20] sm:$0xff]
        %v265 = vld [vmem:[#allocation5 + $0x28] sm:$0xff]
        %v266 = vld [vmem:[#allocation5 + $0x30] sm:$0xff]
        %v267 = vld [vmem:[#allocation5 + $0x38] sm:$0xff]
        %v268 = vld [vmem:[#allocation5 + $0x40] sm:$0xff]
        %v269 = vld [vmem:[#allocation5 + $0x48] sm:$0xff]
        %v270 = vld [vmem:[#allocation5 + $0x50] sm:$0xff]
        %v271 = vld [vmem:[#allocation5 + $0x58] sm:$0xff]
        %v272 = vld [vmem:[#allocation5 + $0x60] sm:$0xff]
        %v273 = vld [vmem:[#allocation5 + $0x68] sm:$0xff]
        %v274 = vld [vmem:[#allocation5 + $0x70] sm:$0xff]
        %v275 = vld [vmem:[#allocation5 + $0x78] sm:$0xff]
        %v276 = vld [vmem:[%s2] sm:$0x1]
        %v278 = vperm.slane %v276, 0
        %280 = vmatpush.msra.mxu0 %v275
        %281 = vmatpush.msra.mxu0 %v274
        %282 = vmatpush.msra.mxu0 %v273
        %283 = vmatpush.msra.mxu0 %v272
        %284 = vmatpush.msra.mxu0 %v271
        %285 = vmatpush.msra.mxu0 %v270
        %286 = vmatpush.msra.mxu0 %v269
        %287 = vmatpush.msra.mxu0 %v268
        %288 = vmatpush.msra.mxu0 %v267
        %289 = vmatpush.msra.mxu0 %v266
        %290 = vmatpush.msra.mxu0 %v265
        %291 = vmatpush.msra.mxu0 %v264
        %292 = vmatpush.msra.mxu0 %v263
        %293 = vmatpush.msra.mxu0 %v262
        %294 = vmatpush.msra.mxu0 %v261
        %295 = vmatpush.msra.mxu0 %v260
        %296 = vmatmul.f32.gmra.mxu0 %v259
        %v297 = vpop.f32.mrf.mxu0
        %v298 = vadd.f32 %v278, %v297
        %299 = vdwg.mxu0
        %v300 = vand.u32 2147483647, %v298
        %v301 = vmul.f32 %v300, 0.70710677
        %v302 = vmul.f32 %v301, 0.3275911
        %v303 = vadd.f32 %v302, 1.0
        %v304 = vrcp.pop %v303
        %v305 = vmul.f32 %v303, %v304
        %v306 = vsub.f32 1.0, %v305
        %v307 = vmul.f32 %v304, %v306
        %v308 = vadd.f32 %v304, %v307
        %vm309 = vweird.f32 %v303
        %vm310 = vweird.f32 %v304
        %vm311 = vmor %vm309, %vm310
        %v312 = vsel %vm311, %v304, %v308
        %v313 = vand.u32 2147483647, %v303
        %vm314 = vcmp.eq.f32.partialorder %v313, 8.507059e+37
        %v315 = vand.u32 %v303, 2147483648
        %v316 = vor.u32 1.1754944e-38, %v315
        %v317 = vsel %vm314, %v316, %v312
        %v318 = vmul.f32 1.0, %v317
        %v319 = vmul.f32 %v318, 1.0614054
        %v320 = vsub.f32 %v319, 1.4531521
        %v321 = vmul.f32 %v320, %v318
        %v322 = vadd.f32 %v321, 1.4214138
        %v323 = vmul.f32 %v322, %v318
        %v324 = vsub.f32 %v323, 0.28449672
        %v325 = vmul.f32 %v324, %v318
        %v326 = vadd.f32 %v325, 0.2548296
        %v327 = vmul.f32 %v326, %v318
        %v328 = vmul.f32 %v301, %v301
        %v329 = vsub.f32 0.0, %v328
        %v330 = vmul.f32 %v329, 1.442695
        %v331 = vpow.pop %v330
        %v332 = vmul.f32 %v327, %v331
        %v333 = vsub.f32 1.0, %v332
        %v334 = vmul.f32 %v300, %v333
        %v335 = vadd.f32 %v298, %v334
        %v336 = vmul.f32 %v335, 0.5
        %337 = vadd.xlane.f32.xlu0 %v336
        %v338 = vpop.xlane.xlu0 %337
        %v339 = vmul.f32 %v336, %v336
        %340 = vadd.xlane.f32.xlu0 %v339
        %v341 = vpop.xlane.xlu0 %340
        %v342 = vmul.f32 %v338, 0.03125
        %v343 = vmul.f32 %v341, 0.03125
        %v344 = vmul.f32 %v342, %v342
        %v345 = vsub.f32 %v343, %v344
        %v346 = vmax.f32 %v345, 0.0
        %v347 = vsub.f32 %v336, %v342
        %v348 = vadd.f32 %v346, 1e-12
        %v349 = vrsqrt.pop %v348
        %v350 = vmul.f32 %v349, %v348
        %v351 = vmul.f32 %v350, %v349
        %v352 = vmul.f32 0.5, %v351
        %v353 = vsub.f32 1.5, %v352
        %v354 = vmul.f32 %v349, %v353
        %vm355 = vweird.f32 %v348
        %vm356 = vweird.f32 %v349
        %vm357 = vmor %vm355, %vm356
        %v358 = vsel %vm357, %v349, %v354
        %v359 = vmul.f32 %v347, %v358
        %v360 = vld [vmem:[%s3] sm:$0x1]
        %v362 = vperm.slane %v360, 0
        %v364 = vmul.f32 %v362, %v359
        %v365 = vld [vmem:[%s4] sm:$0x1]
        %v367 = vperm.slane %v365, 0
        %v369 = vadd.f32 %v364, %v367
        %370 = vst [vmem:[%s258] sm:$0xff] %v369
        %s371 = sand.u32 %s141, 1
        %s372 = scalar_lea.sflag [#allocation4], %s371
        %s373 = sand.u32 %s141, 1
        %s374 = smul.addr %s373, 8
        %s375 = scalar_lea.vmem [#allocation7], %s374
        // Predicated region
        $region49: #{tpu_custom_call.1} parent=39 // pred_check
          %p376 = pneg %p151
        $region50: #{tpu_custom_call.1} parent=39 // pred_check_branch
          %378 = sbr.rel (%p376) target = $region52
        $region51: #{tpu_custom_call.1} parent=39 // pred_region
          %380 = vsyncadd %s372, 0
          %s381 = smul.addr %s23, 8
          %s382 = scalar_lea.hbm %s5, %s381
          %s384 = sshll.u32 %s375, 4
          %s385 = int_to_ptr.vmem [resolvable:$true] %s384
          %s386 = sshll.u32 %s382, 4
          %s387 = int_to_ptr.hbm [resolvable:$true] %s386
          %389 = dma.vmem_to_hbm [thread:$0]  %s385, 128, %s387, %s372
        $region52: #{tpu_custom_call.1} parent=39 // pred_fallthru
          _
      $region40: #{tpu_custom_call.1} parent=5 // pred_fallthru
        _
      %p390 = scmp.le.s32.totalorder 2, %s18
      // Predicated region
      $region53: #{tpu_custom_call.1} parent=5 // pred_check
        %p391 = pneg %p390
      $region54: #{tpu_custom_call.1} parent=5 // pred_check_branch
        %393 = sbr.rel (%p391) target = $region56
      $region55: #{tpu_custom_call.1} parent=5 // pred_region
        %s394 = ssub.s32 %s18, 2
        // Predicated region
        $region57: #{tpu_custom_call.1} parent=55 // pred_check
          %p395 = pneg %p157
        $region58: #{tpu_custom_call.1} parent=55 // pred_check_branch
          %397 = sbr.rel (%p395) target = $region60
        $region59: #{tpu_custom_call.1} parent=55 // pred_region
          %s398 = sand.u32 %s142, 1
          %s399 = scalar_lea.sflag [#allocation4], %s398
          %s400 = sand.u32 %s142, 1
          %s401 = smul.addr %s400, 8
          %s402 = scalar_lea.vmem [#allocation7], %s401
          %404 = dma.done %s399, 128
        $region60: #{tpu_custom_call.1} parent=55 // pred_fallthru
          _
      $region56: #{tpu_custom_call.1} parent=5 // pred_fallthru
        _
    $region6: #{tpu_custom_call.1} parent=1 // loop_footer
      %s22 = sadd.s32 1, %s18
    $region7: #{tpu_custom_call.1} parent=1 // loop_footer_branch
      %17 = sbr.rel target = $region3
    $region8: #{tpu_custom_call.1} parent=1 // loop_exit
      _
    %405 = vsyncpa [#allocation3], 1
    %s406 = scalar_lea.sflag [#allocation3], 1
    %407 = vsyncpa %s406, 1
    %408 = vsyncpa [#allocation6], 1
    %409 = vsyncpa [#allocation4], 1
    %s410 = scalar_lea.sflag [#allocation4], 1
    %411 = vsyncpa %s410, 1

</llo_original>
